<compile_context>
chip_gen: v7x
topology: tpu7x:2x2x1
jax: 0.10.0
libtpu: 0.0.40
codegen_flags: <defaults>
</compile_context>

<pallas_src>
import jax
import jax.numpy as jnp
from jax.experimental import pallas as pl
from jax.experimental.pallas import tpu as pltpu

# Module hyper-parameters (globals in the original file).
N_LAYER = 2            # number of hidden fc2 blocks
N_NEURONS = 32         # hidden width
LN_EPS = 1e-5          # torch.nn.LayerNorm default eps
TANH_GAIN = 5.0 / 3.0  # nn.init.calculate_gain('tanh')

# Batch threshold above which the feature-major (transposed) layout is used.
FEATURE_MAJOR_MIN_BATCH = 128


def _round_up(x, m):
    return ((x + m - 1) // m) * m


def _pick_tb(batch):
    """Batch tile (lane axis) for the feature-major path."""
    bp = _round_up(batch, 128)
    if bp <= 128:
        return 128
    # >= 2 grid blocks so v7x can shard the "parallel" batch axis across its
    # two TensorCores; cap at 2048 lanes (256 KB f32 activation tile).
    return min(2048, _round_up(pl.cdiv(bp, 2), 128))


# ---------------------------------------------------------------------------
# Kernels
# ---------------------------------------------------------------------------

def _mlp_fm_kernel(x_ref, *refs):
    """Feature-major fused forward. Activations are (features, batch_tile).

    refs = (w_0, ..., w_{L-1}, c_ref, o_ref)
      w_l   : (Dout_l, Din_l) PyTorch-native weights (previous layer's LN
              affine already folded in).
      c_ref : (L+2, Dout, 1) = [b'_0, ..., b'_{L-1}, gamma_last, beta_last]
    """
    o_ref = refs[-1]
    c_ref = refs[-2]
    w_refs = refs[:-2]
    n_layers = len(w_refs)

    h = x_ref[...].astype(jnp.float32)                       # (Din, tb)
    for l in range(n_layers):                                # static unroll
        z = jnp.dot(w_refs[l][...], h, preferred_element_type=jnp.float32)
        z = jnp.tanh(z + c_ref[l])                           # bias: col bcast
        mu = jnp.mean(z, axis=0, keepdims=True)              # sublane reduce
        d = z - mu                                           # centered once
        var = jnp.mean(d * d, axis=0, keepdims=True)
        h = d * jax.lax.rsqrt(var + LN_EPS)                  # affine folded
    h = h * c_ref[n_layers] + c_ref[n_layers + 1]            # last-layer affine
    o_ref[...] = h.astype(o_ref.dtype)


def _mlp_bm_kernel(x_ref, *refs):
    """Batch-major fused forward (small batches). Activations (B, features).

    refs = (w_0, ..., w_{L-1}, c_ref, o_ref)
      w_l   : (Din_l, Dout_l)
      c_ref : (L+2, 1, Dout)
    """
    o_ref = refs[-1]
    c_ref = refs[-2]
    w_refs = refs[:-2]
    n_layers = len(w_refs)

    h = x_ref[...].astype(jnp.float32)                       # (B, Din)
    for l in range(n_layers):                                # static unroll
        z = jnp.dot(h, w_refs[l][...], preferred_element_type=jnp.float32)
        z = jnp.tanh(z + c_ref[l])
        mu = jnp.mean(z, axis=-1, keepdims=True)
        d = z - mu
        var = jnp.mean(d * d, axis=-1, keepdims=True)
        h = d * jax.lax.rsqrt(var + LN_EPS)
    h = h * c_ref[n_layers] + c_ref[n_layers + 1]
    o_ref[...] = h.astype(o_ref.dtype)


# ---------------------------------------------------------------------------
# Parameter preparation (prep-time, outside the kernel / jitted forward)
# ---------------------------------------------------------------------------

def prepare_params(params, feature_major):
    """Fold each layer's LayerNorm affine into the NEXT layer's linear and
    pack all per-layer constants into one array.

    params: list of (W (out,in), b (out,), gamma (out,), beta (out,)).
    Returns (ws, consts):
      feature_major: ws[l] is (out, in); consts is (L+2, Dout, 1)
      batch-major  : ws[l] is (in, out); consts is (L+2, 1, Dout)
      consts rows  : [b'_0, ..., b'_{L-1}, gamma_last, beta_last]
    """
    ws, bs = [], []
    for l, (w, b, _, _) in enumerate(params):
        w = jnp.asarray(w, jnp.float32)
        b = jnp.asarray(b, jnp.float32)
        if l > 0:
            g_prev = jnp.asarray(params[l - 1][2], jnp.float32)
            beta_prev = jnp.asarray(params[l - 1][3], jnp.float32)
            b = b + w @ beta_prev           # b' = b + W @ beta_{l-1}
            w = w * g_prev[None, :]         # W' = W @ diag(gamma_{l-1})
        ws.append(w if feature_major else w.T)
        bs.append(b)
    gamma_last = jnp.asarray(params[-1][2], jnp.float32)
    beta_last = jnp.asarray(params[-1][3], jnp.float32)
    consts = jnp.stack(bs + [gamma_last, beta_last], axis=0)    # (L+2, Dout)
    consts = consts[:, :, None] if feature_major else consts[:, None, :]
    return tuple(ws), consts


# ---------------------------------------------------------------------------
# pallas_call wrappers
# ---------------------------------------------------------------------------

def _mlp_forward_bm(x, ws, consts):
    """Small-batch path: batch-major, single block (whole arrays in VMEM)."""
    B, _ = x.shape
    Dout = ws[-1].shape[1]
    n_in = 1 + len(ws) + 1
    return pl.pallas_call(
        _mlp_bm_kernel,
        out_shape=jax.ShapeDtypeStruct((B, Dout), x.dtype),
        in_specs=[pl.BlockSpec(memory_space=pltpu.MemorySpace.VMEM)] * n_in,
        out_specs=pl.BlockSpec(memory_space=pltpu.MemorySpace.VMEM),
    )(x, *ws, consts)


def _mlp_forward_fm(x, ws, consts):
    """Large-batch path: feature-major (batch on lanes), tiled over batch."""
    B, Din = x.shape
    Dout = ws[-1].shape[0]
    tb = _pick_tb(B)
    bp = _round_up(B, tb)

    xt = jnp.transpose(x)                          # (Din, B) layout plumbing
    if bp != B:
        xt = jnp.pad(xt, ((0, 0), (0, bp - B)))    # padded tail block
    grid = (bp // tb,)

    flat = [xt]
    in_specs = [pl.BlockSpec((Din, tb), lambda i: (0, i))]
    for w in ws:
        flat.append(w)
        # Full-array block + constant index_map: weights DMA'd once, resident
        # in VMEM across all batch tiles.
        in_specs.append(pl.BlockSpec(w.shape, lambda i: (0, 0)))
    flat.append(consts)
    in_specs.append(pl.BlockSpec(consts.shape, lambda i: (0, 0, 0)))

    out_t = pl.pallas_call(
        _mlp_fm_kernel,
        out_shape=jax.ShapeDtypeStruct((Dout, bp), x.dtype),
        grid=grid,
        in_specs=in_specs,
        out_specs=pl.BlockSpec((Dout, tb), lambda i: (0, i)),
        compiler_params=pltpu.CompilerParams(
            dimension_semantics=("parallel",)),
    )(*flat)
    return jnp.transpose(out_t[:, :B])


class PallasMLP:
    """Functional stand-in for the PyTorch MLP module (forward only)."""

    def __init__(self, params):
        # Prep once (affine folding + constant packing), not per call.
        self._bm = prepare_params(params, feature_major=False)
        self._fm = prepare_params(params, feature_major=True)
        self._fwd_bm = jax.jit(_mlp_forward_bm)
        self._fwd_fm = jax.jit(_mlp_forward_fm)

    def __call__(self, x):
        if x.shape[0] >= FEATURE_MAJOR_MIN_BATCH:
            ws, consts = self._fm
            return self._fwd_fm(x, ws, consts)
        ws, consts = self._bm
        return self._fwd_bm(x, ws, consts)


# ---------------------------------------------------------------------------
# Reference + init (mirrors the PyTorch module)
# ---------------------------------------------------------------------------

def init_params(key, input_dim, n_neurons, n_layer, dtype=jnp.float32):
    """PyTorch-style init: orthogonal W (tanh gain, shape (out, in)),
    zero bias, LayerNorm gamma=1, beta=0."""
    orth = jax.nn.initializers.orthogonal(scale=TANH_GAIN)
    dims = [(input_dim, n_neurons)] + [(n_neurons, n_neurons)] * n_layer
    params = []
    for din, dout in dims:
        key, wk = jax.random.split(key)
        w = orth(wk, (dout, din), dtype)            # torch-native (out, in)
        params.append((w, jnp.zeros((dout,), dtype),
                       jnp.ones((dout,), dtype), jnp.zeros((dout,), dtype)))
    return params


def mlp_forward_ref(x, params):
    """Pure-JAX reference matching torch semantics exactly."""
    h = x
    for (w, b, gamma, beta) in params:
        z = jnp.tanh(h @ w.T + b)
        mu = jnp.mean(z, axis=-1, keepdims=True)
        var = jnp.mean((z - mu) ** 2, axis=-1, keepdims=True)
        h = (z - mu) / jnp.sqrt(var + LN_EPS) * gamma + beta
    return h


if __name__ == "__main__":
    key = jax.random.PRNGKey(0)
    kx, kp, kb, kx2 = jax.random.split(key, 4)

    batch, input_dim = 8, 16
    x = jax.random.normal(kx, (batch, input_dim), jnp.float32)

    params = init_params(kp, input_dim, N_NEURONS, N_LAYER)
    # Perturb bias / LN gamma / LN beta away from the (0, 1, 0) init so the
    # affine-folding path is actually exercised by the numerical check
    # (forward semantics hold for arbitrary trained parameter values).
    perturbed = []
    for (w, b, g, be) in params:
        kb, k1, k2, k3 = jax.random.split(kb, 4)
        perturbed.append((
            w,
            b + 0.1 * jax.random.normal(k1, b.shape, b.dtype),
            g + 0.1 * jax.random.normal(k2, g.shape, g.dtype),
            be + 0.1 * jax.random.normal(k3, be.shape, be.dtype)))
    params = perturbed

    model = PallasMLP(params)

    # Small batch -> batch-major single-block path.
    out = jax.block_until_ready(model(x))
    ref = mlp_forward_ref(x, params)
    assert out.shape == (batch, N_NEURONS)
    assert jnp.allclose(out, ref, atol=2e-4, rtol=2e-4), "small-batch mismatch"

    # Large batch -> feature-major path; 384 is not a multiple of the 256-lane
    # tile, so this also exercises the padded tail block and the 2-block grid.
    x_big = jax.random.normal(kx2, (384, input_dim), jnp.float32)
    out_big = jax.block_until_ready(model(x_big))
    ref_big = mlp_forward_ref(x_big, params)
    assert out_big.shape == (384, N_NEURONS)
    assert jnp.allclose(out_big, ref_big, atol=2e-4, rtol=2e-4), "large-batch mismatch"

    print("KERNEL_OK")
</pallas_src>

<mosaic_0001>
module attributes {stable_mosaic.version = 11 : i64} {
  func.func @_mlp_bm_kernel(%arg0: memref<8x16xf32, #tpu.memory_space<vmem>>, %arg1: memref<16x32xf32, #tpu.memory_space<vmem>>, %arg2: memref<32x32xf32, #tpu.memory_space<vmem>>, %arg3: memref<32x32xf32, #tpu.memory_space<vmem>>, %arg4: memref<5x1x32xf32, #tpu.memory_space<vmem>>, %arg5: memref<8x32xf32, #tpu.memory_space<vmem>>) attributes {dimension_semantics = [], scalar_prefetch = 0 : i64, scratch_operands = 0 : i64, tpu.core_type = #tpu.core_type<tc>} {
    %c0 = arith.constant 0 : index
    %c0_0 = arith.constant 0 : index
    %0 = vector.load %arg0[%c0, %c0_0] : memref<8x16xf32, #tpu.memory_space<vmem>>, vector<8x16xf32>
    %c0_1 = arith.constant 0 : index
    %c0_2 = arith.constant 0 : index
    %1 = vector.load %arg1[%c0_1, %c0_2] : memref<16x32xf32, #tpu.memory_space<vmem>>, vector<16x32xf32>
    %cst = arith.constant dense<0.000000e+00> : vector<8x32xf32>
    %2 = tpu.matmul %0, %1, %cst {dimension_numbers = #tpu.dot_dimension_numbers<[1], [0], [0], [1], [0, 0, 1, 1], [], []>} : vector<8x16xf32>, vector<16x32xf32>, vector<8x32xf32> -> vector<8x32xf32>
    %c0_3 = arith.constant 0 : index
    %c0_4 = arith.constant 0 : index
    %c0_5 = arith.constant 0 : index
    %3 = vector.load %arg4[%c0_3, %c0_4, %c0_5] : memref<5x1x32xf32, #tpu.memory_space<vmem>>, vector<1x1x32xf32>
    %4 = vector.shape_cast %3 : vector<1x1x32xf32> to vector<1x32xf32>
    %5 = vector.broadcast %4 : vector<1x32xf32> to vector<8x32xf32>
    %6 = arith.addf %2, %5 : vector<8x32xf32>
    %7 = math.tanh %6 : vector<8x32xf32>
    %cst_6 = arith.constant dense<0.000000e+00> : vector<8xf32>
    %8 = vector.multi_reduction <add>, %7, %cst_6 [1] : vector<8x32xf32> to vector<8xf32>
    %9 = vector.shape_cast %8 : vector<8xf32> to vector<8x1xf32>
    %cst_7 = arith.constant 3.200000e+01 : f32
    %10 = vector.broadcast %cst_7 : f32 to vector<8x1xf32>
    %11 = arith.divf %9, %10 : vector<8x1xf32>
    %12 = vector.broadcast %11 : vector<8x1xf32> to vector<8x32xf32>
    %13 = arith.subf %7, %12 : vector<8x32xf32>
    %14 = arith.mulf %13, %13 : vector<8x32xf32>
    %cst_8 = arith.constant dense<0.000000e+00> : vector<8xf32>
    %15 = vector.multi_reduction <add>, %14, %cst_8 [1] : vector<8x32xf32> to vector<8xf32>
    %16 = vector.shape_cast %15 : vector<8xf32> to vector<8x1xf32>
    %cst_9 = arith.constant 3.200000e+01 : f32
    %17 = vector.broadcast %cst_9 : f32 to vector<8x1xf32>
    %18 = arith.divf %16, %17 : vector<8x1xf32>
    %cst_10 = arith.constant 9.99999974E-6 : f32
    %19 = vector.broadcast %cst_10 : f32 to vector<8x1xf32>
    %20 = arith.addf %18, %19 : vector<8x1xf32>
    %21 = math.rsqrt %20 : vector<8x1xf32>
    %22 = vector.broadcast %21 : vector<8x1xf32> to vector<8x32xf32>
    %23 = arith.mulf %13, %22 : vector<8x32xf32>
    %c0_11 = arith.constant 0 : index
    %c0_12 = arith.constant 0 : index
    %24 = vector.load %arg2[%c0_11, %c0_12] : memref<32x32xf32, #tpu.memory_space<vmem>>, vector<32x32xf32>
    %cst_13 = arith.constant dense<0.000000e+00> : vector<8x32xf32>
    %25 = tpu.matmul %23, %24, %cst_13 {dimension_numbers = #tpu.dot_dimension_numbers<[1], [0], [0], [1], [0, 0, 1, 1], [], []>} : vector<8x32xf32>, vector<32x32xf32>, vector<8x32xf32> -> vector<8x32xf32>
    %c1 = arith.constant 1 : index
    %c0_14 = arith.constant 0 : index
    %c0_15 = arith.constant 0 : index
    %26 = vector.load %arg4[%c1, %c0_14, %c0_15] : memref<5x1x32xf32, #tpu.memory_space<vmem>>, vector<1x1x32xf32>
    %27 = vector.shape_cast %26 : vector<1x1x32xf32> to vector<1x32xf32>
    %28 = vector.broadcast %27 : vector<1x32xf32> to vector<8x32xf32>
    %29 = arith.addf %25, %28 : vector<8x32xf32>
    %30 = math.tanh %29 : vector<8x32xf32>
    %cst_16 = arith.constant dense<0.000000e+00> : vector<8xf32>
    %31 = vector.multi_reduction <add>, %30, %cst_16 [1] : vector<8x32xf32> to vector<8xf32>
    %32 = vector.shape_cast %31 : vector<8xf32> to vector<8x1xf32>
    %cst_17 = arith.constant 3.200000e+01 : f32
    %33 = vector.broadcast %cst_17 : f32 to vector<8x1xf32>
    %34 = arith.divf %32, %33 : vector<8x1xf32>
    %35 = vector.broadcast %34 : vector<8x1xf32> to vector<8x32xf32>
    %36 = arith.subf %30, %35 : vector<8x32xf32>
    %37 = arith.mulf %36, %36 : vector<8x32xf32>
    %cst_18 = arith.constant dense<0.000000e+00> : vector<8xf32>
    %38 = vector.multi_reduction <add>, %37, %cst_18 [1] : vector<8x32xf32> to vector<8xf32>
    %39 = vector.shape_cast %38 : vector<8xf32> to vector<8x1xf32>
    %cst_19 = arith.constant 3.200000e+01 : f32
    %40 = vector.broadcast %cst_19 : f32 to vector<8x1xf32>
    %41 = arith.divf %39, %40 : vector<8x1xf32>
    %cst_20 = arith.constant 9.99999974E-6 : f32
    %42 = vector.broadcast %cst_20 : f32 to vector<8x1xf32>
    %43 = arith.addf %41, %42 : vector<8x1xf32>
    %44 = math.rsqrt %43 : vector<8x1xf32>
    %45 = vector.broadcast %44 : vector<8x1xf32> to vector<8x32xf32>
    %46 = arith.mulf %36, %45 : vector<8x32xf32>
    %c0_21 = arith.constant 0 : index
    %c0_22 = arith.constant 0 : index
    %47 = vector.load %arg3[%c0_21, %c0_22] : memref<32x32xf32, #tpu.memory_space<vmem>>, vector<32x32xf32>
    %cst_23 = arith.constant dense<0.000000e+00> : vector<8x32xf32>
    %48 = tpu.matmul %46, %47, %cst_23 {dimension_numbers = #tpu.dot_dimension_numbers<[1], [0], [0], [1], [0, 0, 1, 1], [], []>} : vector<8x32xf32>, vector<32x32xf32>, vector<8x32xf32> -> vector<8x32xf32>
    %c2 = arith.constant 2 : index
    %c0_24 = arith.constant 0 : index
    %c0_25 = arith.constant 0 : index
    %49 = vector.load %arg4[%c2, %c0_24, %c0_25] : memref<5x1x32xf32, #tpu.memory_space<vmem>>, vector<1x1x32xf32>
    %50 = vector.shape_cast %49 : vector<1x1x32xf32> to vector<1x32xf32>
    %51 = vector.broadcast %50 : vector<1x32xf32> to vector<8x32xf32>
    %52 = arith.addf %48, %51 : vector<8x32xf32>
    %53 = math.tanh %52 : vector<8x32xf32>
    %cst_26 = arith.constant dense<0.000000e+00> : vector<8xf32>
    %54 = vector.multi_reduction <add>, %53, %cst_26 [1] : vector<8x32xf32> to vector<8xf32>
    %55 = vector.shape_cast %54 : vector<8xf32> to vector<8x1xf32>
    %cst_27 = arith.constant 3.200000e+01 : f32
    %56 = vector.broadcast %cst_27 : f32 to vector<8x1xf32>
    %57 = arith.divf %55, %56 : vector<8x1xf32>
    %58 = vector.broadcast %57 : vector<8x1xf32> to vector<8x32xf32>
    %59 = arith.subf %53, %58 : vector<8x32xf32>
    %60 = arith.mulf %59, %59 : vector<8x32xf32>
    %cst_28 = arith.constant dense<0.000000e+00> : vector<8xf32>
    %61 = vector.multi_reduction <add>, %60, %cst_28 [1] : vector<8x32xf32> to vector<8xf32>
    %62 = vector.shape_cast %61 : vector<8xf32> to vector<8x1xf32>
    %cst_29 = arith.constant 3.200000e+01 : f32
    %63 = vector.broadcast %cst_29 : f32 to vector<8x1xf32>
    %64 = arith.divf %62, %63 : vector<8x1xf32>
    %cst_30 = arith.constant 9.99999974E-6 : f32
    %65 = vector.broadcast %cst_30 : f32 to vector<8x1xf32>
    %66 = arith.addf %64, %65 : vector<8x1xf32>
    %67 = math.rsqrt %66 : vector<8x1xf32>
    %68 = vector.broadcast %67 : vector<8x1xf32> to vector<8x32xf32>
    %69 = arith.mulf %59, %68 : vector<8x32xf32>
    %c3 = arith.constant 3 : index
    %c0_31 = arith.constant 0 : index
    %c0_32 = arith.constant 0 : index
    %70 = vector.load %arg4[%c3, %c0_31, %c0_32] : memref<5x1x32xf32, #tpu.memory_space<vmem>>, vector<1x1x32xf32>
    %71 = vector.shape_cast %70 : vector<1x1x32xf32> to vector<1x32xf32>
    %72 = vector.broadcast %71 : vector<1x32xf32> to vector<8x32xf32>
    %73 = arith.mulf %69, %72 : vector<8x32xf32>
    %c4 = arith.constant 4 : index
    %c0_33 = arith.constant 0 : index
    %c0_34 = arith.constant 0 : index
    %74 = vector.load %arg4[%c4, %c0_33, %c0_34] : memref<5x1x32xf32, #tpu.memory_space<vmem>>, vector<1x1x32xf32>
    %75 = vector.shape_cast %74 : vector<1x1x32xf32> to vector<1x32xf32>
    %76 = vector.broadcast %75 : vector<1x32xf32> to vector<8x32xf32>
    %77 = arith.addf %73, %76 : vector<8x32xf32>
    %c0_35 = arith.constant 0 : index
    %c0_36 = arith.constant 0 : index
    %78 = vector.load %arg5[%c0_35, %c0_36] : memref<8x32xf32, #tpu.memory_space<vmem>>, vector<8x32xf32>
    tpu.vector_store %arg5[%c0_35, %c0_36], %77 {strides = array<i32>} : memref<8x32xf32, #tpu.memory_space<vmem>>, vector<8x32xf32>,
    return
  }
}

</mosaic_0001>

<llo_original>
// kernel: _mlp_forward_bm.1
$region0: #{_mlp_forward_bm.1}
  #allocation0 [shape = 'u32[]', space=smem, size = 0x4, offset = 0x4, fixed_abs, tag = 'smem constant byte address 0x4 - core index']
  #allocation1 [shape = 'u32[144,128]{1,0:T(1,128)}', space=vmem, size = 0x12000, scoped, tag = 'internal scratch']
  %s0 = inlined_call_operand.hbm [shape: f32[8,16], index: 0, kind: input, shape index: {}]
  %s1 = inlined_call_operand.hbm [shape: f32[16,32], index: 1, kind: input, shape index: {}]
  %s2 = inlined_call_operand.hbm [shape: f32[32,32], index: 2, kind: input, shape index: {}]
  %s3 = inlined_call_operand.hbm [shape: f32[32,32], index: 3, kind: input, shape index: {}]
  %s4 = inlined_call_operand.vmem [shape: f32[5,1,32], index: 4, kind: input, shape index: {}]
  %s5 = inlined_call_operand.hbm [shape: f32[8,32], index: 5, kind: output, shape index: {}]
  %s6 = sld [smem:[#allocation0]]
  $region46: #{_mlp_forward_bm.1} parent=0
    _
  %s8 = ssub.s32 1, %s6
  %s9 = scalar_select 0, %s8, %s6
  $region1: #{_mlp_forward_bm.1} parent=0
    #allocation2 [shape = 'u8[4096]{0}', space=vmem, size = 0x1000, scoped, tag = 'input window, operand 0, single buffered']
    #allocation3 [shape = 's32[1]{0}', space=sflag, size = 0x4, scoped, tag = 'scoped memory for _mlp_forward_bm.1']
    #allocation4 [shape = 's32[1]{0}', space=sflag, size = 0x4, scoped, tag = 'scoped memory for _mlp_forward_bm.1']
    #allocation5 [shape = 'u8[8192]{0}', space=vmem, size = 0x2000, scoped, tag = 'input window, operand 1, single buffered']
    #allocation6 [shape = 's32[1]{0}', space=sflag, size = 0x4, scoped, tag = 'scoped memory for _mlp_forward_bm.1']
    #allocation7 [shape = 'u8[16384]{0}', space=vmem, size = 0x4000, scoped, tag = 'input window, operand 2, single buffered']
    #allocation8 [shape = 'u8[16384]{0}', space=vmem, size = 0x4000, scoped, tag = 'input window, operand 3, single buffered']
    #allocation9 [shape = 's32[1]{0}', space=sflag, size = 0x4, scoped, tag = 'scoped memory for _mlp_forward_bm.1']
    #allocation10 [shape = 'u8[4096]{0}', space=vmem, size = 0x1000, scoped, tag = 'output window, operand 0, single buffered']
    %10 = vsyncpa [#allocation3], 0
    %11 = vsyncpa [#allocation6], 0
    %12 = vsyncpa [#allocation9], 0
    %13 = vsyncpa [#allocation4], 0
    // Predicated region
    $region2: #{_mlp_forward_bm.1} parent=1 // pred_check
      _
    $region3: #{_mlp_forward_bm.1} parent=1 // pred_check_branch
      %15 = sbr.rel (0) target = $region5
    $region4: #{_mlp_forward_bm.1} parent=1 // pred_region
      %s17 = ssub.s32 128, 128
      %18 = vsyncadd [#allocation3], %s17
      %s20 = sshll.u32 [#allocation2], 4
      %s21 = int_to_ptr.vmem [resolvable:$true] %s20
      %23 = dma.hbm_to_vmem [thread:$0]  %s0, 128, %s21, [#allocation3]
    $region5: #{_mlp_forward_bm.1} parent=1 // pred_fallthru
      _
    // Predicated region
    $region6: #{_mlp_forward_bm.1} parent=1 // pred_check
      _
    $region7: #{_mlp_forward_bm.1} parent=1 // pred_check_branch
      %25 = sbr.rel (0) target = $region9
    $region8: #{_mlp_forward_bm.1} parent=1 // pred_region
      %s27 = ssub.s32 256, 256
      %28 = vsyncadd [#allocation6], %s27
      %s29 = sshll.u32 [#allocation5], 4
      %s30 = int_to_ptr.vmem [resolvable:$true] %s29
      %35 = dma.hbm_to_vmem [thread:$0]  %s1, 256, %s30, [#allocation6], 128, 128, 8
    $region9: #{_mlp_forward_bm.1} parent=1 // pred_fallthru
      _
    // Predicated region
    $region10: #{_mlp_forward_bm.1} parent=1 // pred_check
      _
    $region11: #{_mlp_forward_bm.1} parent=1 // pred_check_branch
      %37 = sbr.rel (0) target = $region13
    $region12: #{_mlp_forward_bm.1} parent=1 // pred_region
      %s39 = ssub.s32 512, 512
      %40 = vsyncadd [#allocation6], %s39
      %s41 = sshll.u32 [#allocation7], 4
      %s42 = int_to_ptr.vmem [resolvable:$true] %s41
      %47 = dma.hbm_to_vmem [thread:$0]  %s2, 512, %s42, [#allocation6], 128, 128, 8
    $region13: #{_mlp_forward_bm.1} parent=1 // pred_fallthru
      _
    // Predicated region
    $region14: #{_mlp_forward_bm.1} parent=1 // pred_check
      _
    $region15: #{_mlp_forward_bm.1} parent=1 // pred_check_branch
      %49 = sbr.rel (0) target = $region17
    $region16: #{_mlp_forward_bm.1} parent=1 // pred_region
      %s51 = ssub.s32 512, 512
      %52 = vsyncadd [#allocation9], %s51
      %s53 = sshll.u32 [#allocation8], 4
      %s54 = int_to_ptr.vmem [resolvable:$true] %s53
      %59 = dma.hbm_to_vmem [thread:$0]  %s3, 512, %s54, [#allocation9], 128, 128, 8
    $region17: #{_mlp_forward_bm.1} parent=1 // pred_fallthru
      _
    // Predicated region
    $region18: #{_mlp_forward_bm.1} parent=1 // pred_check
      _
    $region19: #{_mlp_forward_bm.1} parent=1 // pred_check_branch
      %61 = sbr.rel (0) target = $region21
    $region20: #{_mlp_forward_bm.1} parent=1 // pred_region
      _
    $region21: #{_mlp_forward_bm.1} parent=1 // pred_fallthru
      _
    // Predicated region
    $region22: #{_mlp_forward_bm.1} parent=1 // pred_check
      _
    $region23: #{_mlp_forward_bm.1} parent=1 // pred_check_branch
      %63 = sbr.rel (0) target = $region25
    $region24: #{_mlp_forward_bm.1} parent=1 // pred_region
      %64 = dma.done [#allocation3], 128
    $region25: #{_mlp_forward_bm.1} parent=1 // pred_fallthru
      _
    // Predicated region
    $region26: #{_mlp_forward_bm.1} parent=1 // pred_check
      _
    $region27: #{_mlp_forward_bm.1} parent=1 // pred_check_branch
      %66 = sbr.rel (0) target = $region29
    $region28: #{_mlp_forward_bm.1} parent=1 // pred_region
      %67 = dma.done [#allocation6], 256
    $region29: #{_mlp_forward_bm.1} parent=1 // pred_fallthru
      _
    // Predicated region
    $region30: #{_mlp_forward_bm.1} parent=1 // pred_check
      _
    $region31: #{_mlp_forward_bm.1} parent=1 // pred_check_branch
      %69 = sbr.rel (0) target = $region33
    $region32: #{_mlp_forward_bm.1} parent=1 // pred_region
      %70 = dma.done [#allocation6], 512
    $region33: #{_mlp_forward_bm.1} parent=1 // pred_fallthru
      _
    // Predicated region
    $region34: #{_mlp_forward_bm.1} parent=1 // pred_check
      _
    $region35: #{_mlp_forward_bm.1} parent=1 // pred_check_branch
      %72 = sbr.rel (0) target = $region37
    $region36: #{_mlp_forward_bm.1} parent=1 // pred_region
      %73 = dma.done [#allocation9], 512
    $region37: #{_mlp_forward_bm.1} parent=1 // pred_fallthru
      _
    %v74 = vld [vmem:[#allocation2] sm:$0xff]
    %v75 = vld [vmem:[#allocation5] sm:$0xff]
    %v76 = vld [vmem:[#allocation5 + $0x8] sm:$0xff]
    %v77 = vld [vmem:[%s4] sm:$0x1]
    %v79 = vlaneseq
    %v80 = vshrl.u32 %v79, 7
    %v81 = vsub.s32 0, %v80
    %v82 = vrot.slane %v77, %v81
    %vm84 = vcmask 130048
    %v86 = vsel %vm84, %v74, 0
    %88 = vmatprep.subr.mxu0 0.0
    %89 = vmatpush1.msra.mxu0 %v75
    %90 = vmatprep.subr.mxu0 0.0
    %91 = vmatpush1.msra.mxu0 %v76
    %92 = vmatprep.subr.mxu0 0.0
    %93 = vmatpush1.msra.mxu0 0.0
    %94 = vmatprep.subr.mxu0 0.0
    %95 = vmatpush1.msra.mxu0 0.0
    %96 = vmatprep.subr.mxu0 0.0
    %97 = vmatpush1.msra.mxu0 0.0
    %98 = vmatprep.subr.mxu0 0.0
    %99 = vmatpush1.msra.mxu0 0.0
    %100 = vmatprep.subr.mxu0 0.0
    %101 = vmatpush1.msra.mxu0 0.0
    %102 = vmatprep.subr.mxu0 0.0
    %103 = vmatpush1.msra.mxu0 0.0
    %104 = vmatprep.subr.mxu0 0.0
    %105 = vmatpush1.msra.mxu0 0.0
    %106 = vmatprep.subr.mxu0 0.0
    %107 = vmatpush1.msra.mxu0 0.0
    %108 = vmatprep.subr.mxu0 0.0
    %109 = vmatpush1.msra.mxu0 0.0
    %110 = vmatprep.subr.mxu0 0.0
    %111 = vmatpush1.msra.mxu0 0.0
    %112 = vmatprep.subr.mxu0 0.0
    %113 = vmatpush1.msra.mxu0 0.0
    %114 = vmatprep.subr.mxu0 0.0
    %115 = vmatpush1.msra.mxu0 0.0
    %116 = vmatprep.subr.mxu0 0.0
    %117 = vmatpush1.msra.mxu0 0.0
    %118 = vmatprep.subr.mxu0 0.0
    %119 = vmatpush1.msra.mxu0 0.0
    %120 = vmatprep.subr.mxu0 0.0
    %121 = vmatpush1.msra.mxu0 0.0
    %122 = vmatprep.subr.mxu0 0.0
    %123 = vmatpush1.msra.mxu0 0.0
    %124 = vmatprep.subr.mxu0 0.0
    %125 = vmatpush1.msra.mxu0 0.0
    %126 = vmatprep.subr.mxu0 0.0
    %127 = vmatpush1.msra.mxu0 0.0
    %128 = vmatprep.subr.mxu0 0.0
    %129 = vmatpush1.msra.mxu0 0.0
    %130 = vmatprep.subr.mxu0 0.0
    %131 = vmatpush1.msra.mxu0 0.0
    %132 = vmatprep.subr.mxu0 0.0
    %133 = vmatpush1.msra.mxu0 0.0
    %134 = vmatprep.subr.mxu0 0.0
    %135 = vmatpush1.msra.mxu0 0.0
    %136 = vmatprep.subr.mxu0 0.0
    %137 = vmatpush1.msra.mxu0 0.0
    %138 = vmatprep.subr.mxu0 0.0
    %139 = vmatpush1.msra.mxu0 0.0
    %140 = vmatprep.subr.mxu0 0.0
    %141 = vmatpush1.msra.mxu0 0.0
    %142 = vmatprep.subr.mxu0 0.0
    %143 = vmatpush1.msra.mxu0 0.0
    %144 = vmatprep.subr.mxu0 0.0
    %145 = vmatpush1.msra.mxu0 0.0
    %146 = vmatprep.subr.mxu0 0.0
    %147 = vmatpush1.msra.mxu0 0.0
    %148 = vmatprep.subr.mxu0 0.0
    %149 = vmatpush1.msra.mxu0 0.0
    %150 = vmatprep.subr.mxu0 0.0
    %151 = vmatpush1.msra.mxu0 0.0
    %152 = vmatprep.mubr.f32.mxu0 0.0
    %153 = vmatmul.mubr.f32.gmra.mrb[0].mxu0 %v86
    %v154 = vpop.f32.mrb[0].mxu0
    %v155 = vadd.f32 %v82, %v154
    %v156 = vpop.f32.mrb[0].mxu0
    %157 = vdwg.mxu0
    %v158 = vtanh.pop %v155
    %vm159 = vcmask 261120
    %v160 = vsel %vm159, %v158, 0.0
    %161 = vadd.xlane.f32.xlu0 %v160
    %v162 = vpop.xlane.xlu0 %161
    %v163 = vrcp.pop 32.0
    %v164 = vmul.f32 %v162, %v163
    %v165 = vsub.f32 %v158, %v164
    %v166 = vmul.f32 %v165, %v165
    %v167 = vsel %vm159, %v166, 0.0
    %168 = vadd.xlane.f32.xlu0 %v167
    %v169 = vpop.xlane.xlu0 %168
    %v170 = vmul.f32 %v169, %v163
    %v171 = vadd.f32 %v170, 1e-05
    %v172 = vrsqrt.pop %v171
    %v173 = vmul.f32 %v165, %v172
    %v174 = vld [vmem:[#allocation7] sm:$0xff]
    %v175 = vld [vmem:[#allocation7 + $0x8] sm:$0xff]
    %v176 = vld [vmem:[#allocation7 + $0x10] sm:$0xff]
    %v177 = vld [vmem:[#allocation7 + $0x18] sm:$0xff]
    %s178 = scalar_lea.vmem %s4, 1
    %v179 = vld [vmem:[%s178] sm:$0x1]
    %v181 = vlaneseq
    %v182 = vshrl.u32 %v181, 7
    %v183 = vsub.s32 0, %v182
    %v184 = vrot.slane %v179, %v183
    %v187 = vsel %vm159, %v173, 0
    %189 = vmatprep.subr.mxu0 0.0
    %190 = vmatpush1.msra.mxu0 %v174
    %191 = vmatprep.subr.mxu0 0.0
    %192 = vmatpush1.msra.mxu0 %v175
    %193 = vmatprep.subr.mxu0 0.0
    %194 = vmatpush1.msra.mxu0 %v176
    %195 = vmatprep.subr.mxu0 0.0
    %196 = vmatpush1.msra.mxu0 %v177
    %197 = vmatprep.subr.mxu0 0.0
    %198 = vmatpush1.msra.mxu0 0.0
    %199 = vmatprep.subr.mxu0 0.0
    %200 = vmatpush1.msra.mxu0 0.0
    %201 = vmatprep.subr.mxu0 0.0
    %202 = vmatpush1.msra.mxu0 0.0
    %203 = vmatprep.subr.mxu0 0.0
    %204 = vmatpush1.msra.mxu0 0.0
    %205 = vmatprep.subr.mxu0 0.0
    %206 = vmatpush1.msra.mxu0 0.0
    %207 = vmatprep.subr.mxu0 0.0
    %208 = vmatpush1.msra.mxu0 0.0
    %209 = vmatprep.subr.mxu0 0.0
    %210 = vmatpush1.msra.mxu0 0.0
    %211 = vmatprep.subr.mxu0 0.0
    %212 = vmatpush1.msra.mxu0 0.0
    %213 = vmatprep.subr.mxu0 0.0
    %214 = vmatpush1.msra.mxu0 0.0
    %215 = vmatprep.subr.mxu0 0.0
    %216 = vmatpush1.msra.mxu0 0.0
    %217 = vmatprep.subr.mxu0 0.0
    %218 = vmatpush1.msra.mxu0 0.0
    %219 = vmatprep.subr.mxu0 0.0
    %220 = vmatpush1.msra.mxu0 0.0
    %221 = vmatprep.subr.mxu0 0.0
    %222 = vmatpush1.msra.mxu0 0.0
    %223 = vmatprep.subr.mxu0 0.0
    %224 = vmatpush1.msra.mxu0 0.0
    %225 = vmatprep.subr.mxu0 0.0
    %226 = vmatpush1.msra.mxu0 0.0
    %227 = vmatprep.subr.mxu0 0.0
    %228 = vmatpush1.msra.mxu0 0.0
    %229 = vmatprep.subr.mxu0 0.0
    %230 = vmatpush1.msra.mxu0 0.0
    %231 = vmatprep.subr.mxu0 0.0
    %232 = vmatpush1.msra.mxu0 0.0
    %233 = vmatprep.subr.mxu0 0.0
    %234 = vmatpush1.msra.mxu0 0.0
    %235 = vmatprep.subr.mxu0 0.0
    %236 = vmatpush1.msra.mxu0 0.0
    %237 = vmatprep.subr.mxu0 0.0
    %238 = vmatpush1.msra.mxu0 0.0
    %239 = vmatprep.subr.mxu0 0.0
    %240 = vmatpush1.msra.mxu0 0.0
    %241 = vmatprep.subr.mxu0 0.0
    %242 = vmatpush1.msra.mxu0 0.0
    %243 = vmatprep.subr.mxu0 0.0
    %244 = vmatpush1.msra.mxu0 0.0
    %245 = vmatprep.subr.mxu0 0.0
    %246 = vmatpush1.msra.mxu0 0.0
    %247 = vmatprep.subr.mxu0 0.0
    %248 = vmatpush1.msra.mxu0 0.0
    %249 = vmatprep.subr.mxu0 0.0
    %250 = vmatpush1.msra.mxu0 0.0
    %251 = vmatprep.subr.mxu0 0.0
    %252 = vmatpush1.msra.mxu0 0.0
    %253 = vmatprep.mubr.f32.mxu0 0.0
    %254 = vmatmul.mubr.f32.gmra.mrb[0].mxu0 %v187
    %v255 = vpop.f32.mrb[0].mxu0
    %v256 = vadd.f32 %v184, %v255
    %v257 = vpop.f32.mrb[0].mxu0
    %258 = vdwg.mxu0
    %v259 = vtanh.pop %v256
    %v260 = vsel %vm159, %v259, 0.0
    %261 = vadd.xlane.f32.xlu0 %v260
    %v262 = vpop.xlane.xlu0 %261
    %v263 = vmul.f32 %v262, %v163
    %v264 = vsub.f32 %v259, %v263
    %v265 = vmul.f32 %v264, %v264
    %v266 = vsel %vm159, %v265, 0.0
    %267 = vadd.xlane.f32.xlu0 %v266
    %v268 = vpop.xlane.xlu0 %267
    %v269 = vmul.f32 %v268, %v163
    %v270 = vadd.f32 %v269, 1e-05
    %v271 = vrsqrt.pop %v270
    %v272 = vmul.f32 %v264, %v271
    %v273 = vld [vmem:[#allocation8] sm:$0xff]
    %v274 = vld [vmem:[#allocation8 + $0x8] sm:$0xff]
    %v275 = vld [vmem:[#allocation8 + $0x10] sm:$0xff]
    %v276 = vld [vmem:[#allocation8 + $0x18] sm:$0xff]
    %s277 = scalar_lea.vmem %s4, 2
    %v278 = vld [vmem:[%s277] sm:$0x1]
    %v280 = vlaneseq
    %v281 = vshrl.u32 %v280, 7
    %v282 = vsub.s32 0, %v281
    %v283 = vrot.slane %v278, %v282
    %v286 = vsel %vm159, %v272, 0
    %288 = vmatprep.subr.mxu0 0.0
    %289 = vmatpush1.msra.mxu0 %v273
    %290 = vmatprep.subr.mxu0 0.0
    %291 = vmatpush1.msra.mxu0 %v274
    %292 = vmatprep.subr.mxu0 0.0
    %293 = vmatpush1.msra.mxu0 %v275
    %294 = vmatprep.subr.mxu0 0.0
    %295 = vmatpush1.msra.mxu0 %v276
    %296 = vmatprep.subr.mxu0 0.0
    %297 = vmatpush1.msra.mxu0 0.0
    %298 = vmatprep.subr.mxu0 0.0
    %299 = vmatpush1.msra.mxu0 0.0
    %300 = vmatprep.subr.mxu0 0.0
    %301 = vmatpush1.msra.mxu0 0.0
    %302 = vmatprep.subr.mxu0 0.0
    %303 = vmatpush1.msra.mxu0 0.0
    %304 = vmatprep.subr.mxu0 0.0
    %305 = vmatpush1.msra.mxu0 0.0
    %306 = vmatprep.subr.mxu0 0.0
    %307 = vmatpush1.msra.mxu0 0.0
    %308 = vmatprep.subr.mxu0 0.0
    %309 = vmatpush1.msra.mxu0 0.0
    %310 = vmatprep.subr.mxu0 0.0
    %311 = vmatpush1.msra.mxu0 0.0
    %312 = vmatprep.subr.mxu0 0.0
    %313 = vmatpush1.msra.mxu0 0.0
    %314 = vmatprep.subr.mxu0 0.0
    %315 = vmatpush1.msra.mxu0 0.0
    %316 = vmatprep.subr.mxu0 0.0
    %317 = vmatpush1.msra.mxu0 0.0
    %318 = vmatprep.subr.mxu0 0.0
    %319 = vmatpush1.msra.mxu0 0.0
    %320 = vmatprep.subr.mxu0 0.0
    %321 = vmatpush1.msra.mxu0 0.0
    %322 = vmatprep.subr.mxu0 0.0
    %323 = vmatpush1.msra.mxu0 0.0
    %324 = vmatprep.subr.mxu0 0.0
    %325 = vmatpush1.msra.mxu0 0.0
    %326 = vmatprep.subr.mxu0 0.0
    %327 = vmatpush1.msra.mxu0 0.0
    %328 = vmatprep.subr.mxu0 0.0
    %329 = vmatpush1.msra.mxu0 0.0
    %330 = vmatprep.subr.mxu0 0.0
    %331 = vmatpush1.msra.mxu0 0.0
    %332 = vmatprep.subr.mxu0 0.0
    %333 = vmatpush1.msra.mxu0 0.0
    %334 = vmatprep.subr.mxu0 0.0
    %335 = vmatpush1.msra.mxu0 0.0
    %336 = vmatprep.subr.mxu0 0.0
    %337 = vmatpush1.msra.mxu0 0.0
    %338 = vmatprep.subr.mxu0 0.0
    %339 = vmatpush1.msra.mxu0 0.0
    %340 = vmatprep.subr.mxu0 0.0
    %341 = vmatpush1.msra.mxu0 0.0
    %342 = vmatprep.subr.mxu0 0.0
    %343 = vmatpush1.msra.mxu0 0.0
    %344 = vmatprep.subr.mxu0 0.0
    %345 = vmatpush1.msra.mxu0 0.0
    %346 = vmatprep.subr.mxu0 0.0
    %347 = vmatpush1.msra.mxu0 0.0
    %348 = vmatprep.subr.mxu0 0.0
    %349 = vmatpush1.msra.mxu0 0.0
    %350 = vmatprep.subr.mxu0 0.0
    %351 = vmatpush1.msra.mxu0 0.0
    %352 = vmatprep.mubr.f32.mxu0 0.0
    %353 = vmatmul.mubr.f32.gmra.mrb[0].mxu0 %v286
    %v354 = vpop.f32.mrb[0].mxu0
    %v355 = vadd.f32 %v283, %v354
    %v356 = vpop.f32.mrb[0].mxu0
    %357 = vdwg.mxu0
    %v358 = vtanh.pop %v355
    %v359 = vsel %vm159, %v358, 0.0
    %360 = vadd.xlane.f32.xlu0 %v359
    %v361 = vpop.xlane.xlu0 %360
    %v362 = vmul.f32 %v361, %v163
    %v363 = vsub.f32 %v358, %v362
    %v364 = vmul.f32 %v363, %v363
    %v365 = vsel %vm159, %v364, 0.0
    %366 = vadd.xlane.f32.xlu0 %v365
    %v367 = vpop.xlane.xlu0 %366
    %v368 = vmul.f32 %v367, %v163
    %v369 = vadd.f32 %v368, 1e-05
    %v370 = vrsqrt.pop %v369
    %v371 = vmul.f32 %v363, %v370
    %s372 = scalar_lea.vmem %s4, 3
    %v373 = vld [vmem:[%s372] sm:$0x1]
    %v375 = vlaneseq
    %v376 = vshrl.u32 %v375, 7
    %v377 = vsub.s32 0, %v376
    %v378 = vrot.slane %v373, %v377
    %v380 = vmul.f32 %v371, %v378
    %s381 = scalar_lea.vmem %s4, 4
    %v382 = vld [vmem:[%s381] sm:$0x1]
    %v384 = vlaneseq
    %v385 = vshrl.u32 %v384, 7
    %v386 = vsub.s32 0, %v385
    %v387 = vrot.slane %v382, %v386
    %v389 = vadd.f32 %v380, %v387
    %390 = vst.msk [vmem:[#allocation10] sm:$0xff] %vm159, %v389
    // Predicated region
    $region38: #{_mlp_forward_bm.1} parent=1 // pred_check
      _
    $region39: #{_mlp_forward_bm.1} parent=1 // pred_check_branch
      %392 = sbr.rel (0) target = $region41
    $region40: #{_mlp_forward_bm.1} parent=1 // pred_region
      %s394 = ssub.s32 128, 128
      %395 = vsyncadd [#allocation4], %s394
      %s397 = sshll.u32 [#allocation10], 4
      %s398 = int_to_ptr.vmem [resolvable:$true] %s397
      %400 = dma.vmem_to_hbm [thread:$0]  %s398, 128, %s5, [#allocation4]
    $region41: #{_mlp_forward_bm.1} parent=1 // pred_fallthru
      _
    // Predicated region
    $region42: #{_mlp_forward_bm.1} parent=1 // pred_check
      _
    $region43: #{_mlp_forward_bm.1} parent=1 // pred_check_branch
      %402 = sbr.rel (0) target = $region45
    $region44: #{_mlp_forward_bm.1} parent=1 // pred_region
      %403 = dma.done [#allocation4], 128
    $region45: #{_mlp_forward_bm.1} parent=1 // pred_fallthru
      _
    %404 = vsyncpa [#allocation3], 1
    %405 = vsyncpa [#allocation6], 1
    %406 = vsyncpa [#allocation9], 1
    %407 = vsyncpa [#allocation4], 1

</llo_original>
